<compile_context>
chip_gen: v5e
topology: v5e:2x2
jax: 0.10.0
libtpu: 0.0.40
codegen_flags: <defaults>
</compile_context>

<pallas_src>
import math

import numpy as np

import jax
import jax.numpy as jnp
from jax import lax
from jax.experimental import pallas as pl
from jax.experimental.pallas import tpu as pltpu

_LANE = 128
_SUBLANE = 8
_INV_SQRT2 = 1.0 / math.sqrt(2.0)
_SQRT_2_OVER_PI = math.sqrt(2.0 / math.pi)


def _round_up(x, m):
    return ((x + m - 1) // m) * m


def _cdiv(a, b):
    return (a + b - 1) // b


def _gelu_exact(y):
    # erf-based GELU (torch.nn.GELU default), evaluated in f32.
    return 0.5 * y * (1.0 + lax.erf(y * _INV_SQRT2))


def _gelu_tanh(y):
    # tanh-approx GELU: tanh goes to the EUP slot -> nearly free next to bf16 MXU work.
    return 0.5 * y * (1.0 + jnp.tanh(_SQRT_2_OVER_PI * (y + 0.044715 * y * y * y)))


def _vmem_capacity_bytes():
    """Per-core VMEM capacity (generation-aware: 128 MiB v5e/v6e, 64 MiB v7x)."""
    try:
        cap = int(pltpu.get_tpu_info().vmem_capacity_bytes)
        if cap > 0:
            return cap
    except Exception:
        pass
    return 64 << 20  # conservative fallback (v7x per-TensorCore VMEM)


def _pick_tm(m, tm_max, min_steps=2):
    """Row-tile size: multiple of 8, <= tm_max, >=2 grid steps when rows allow."""
    mr = _round_up(m, _SUBLANE)
    tm_max = max(_SUBLANE, min((int(tm_max) // _SUBLANE) * _SUBLANE, mr))
    steps = _cdiv(m, tm_max)
    if mr >= min_steps * _SUBLANE:
        steps = max(steps, min_steps)
    return _round_up(_cdiv(m, steps), _SUBLANE)


def _resident_spec(shape, single_buffer):
    """BlockSpec for a block that is constant across the (1-D) row grid.

    single_buffer=True requests pl.Buffered(1): keep ONE copy of the resident
    weights in VMEM instead of the default double buffering (constant index_map
    means the block is fetched once anyway).
    """
    ndim = len(shape)
    index_map = lambda i: (0,) * ndim
    if single_buffer:
        try:
            return pl.BlockSpec(shape, index_map, pipeline_mode=pl.Buffered(1))
        except Exception:  # pallas version without pipeline_mode / Buffered
            pass
    return pl.BlockSpec(shape, index_map)


# -----------------------------------------------------------------------------
# Kernels.
# -----------------------------------------------------------------------------
def _make_fused_kernel(num_rest, gelu):
    """Whole-MLP kernel: all weights resident in VMEM, layer loop inside."""

    def layer(h, w, b):
        y = jnp.dot(h.astype(w.dtype), w, preferred_element_type=jnp.float32)
        return gelu(y + b)                       # bias + GELU in f32

    if num_rest == 0:
        def kernel(x_ref, w0_ref, b0_ref, o_ref):
            o_ref[...] = layer(x_ref[...], w0_ref[...], b0_ref[...]).astype(o_ref.dtype)
    elif num_rest <= 4:
        def kernel(x_ref, w0_ref, b0_ref, wr_ref, br_ref, o_ref):
            h = layer(x_ref[...], w0_ref[...], b0_ref[...])
            for l in range(num_rest):            # short static unroll
                h = layer(h, wr_ref[l], br_ref[l])
            o_ref[...] = h.astype(o_ref.dtype)
    else:
        def kernel(x_ref, w0_ref, b0_ref, wr_ref, br_ref, o_ref):
            # fori_loop bounds live ranges for deep stacks (VMEM / vreg pressure).
            h = layer(x_ref[...], w0_ref[...], b0_ref[...])
            h = lax.fori_loop(0, num_rest,
                              lambda l, h: layer(h, wr_ref[l], br_ref[l]), h)
            o_ref[...] = h.astype(o_ref.dtype)
    return kernel


def _make_layer_kernel(gelu):
    """One Linear+GELU with the whole (padded) weight resident in VMEM."""
    def kernel(x_ref, w_ref, b_ref, o_ref):
        y = jnp.dot(x_ref[...].astype(w_ref.dtype), w_ref[...],
                    preferred_element_type=jnp.float32)
        o_ref[...] = gelu(y + b_ref[...]).astype(o_ref.dtype)
    return kernel


def _make_tiled_kernel(gelu):
    """M/N/K-tiled Linear+GELU with f32 VMEM accumulator (last-resort path)."""
    def kernel(x_ref, w_ref, b_ref, o_ref, acc_ref):
        k = pl.program_id(2)

        @pl.when(k == 0)
        def _():
            acc_ref[...] = jnp.zeros_like(acc_ref)

        acc_ref[...] += jnp.dot(x_ref[...].astype(w_ref.dtype), w_ref[...],
                                preferred_element_type=jnp.float32)

        @pl.when(k == pl.num_programs(2) - 1)
        def _():
            o_ref[...] = gelu(acc_ref[...] + b_ref[...]).astype(o_ref.dtype)
    return kernel


# -----------------------------------------------------------------------------
# pallas_call wrappers.
# -----------------------------------------------------------------------------
def _fused_forward(x, w0, b0, wr, br, out_dim, gelu, vmem_cap):
    M, K = x.shape
    K0p, D = w0.shape
    num_rest = 0 if wr is None else wr.shape[0]

    a_item = np.dtype(x.dtype).itemsize
    w_item = np.dtype(w0.dtype).itemsize
    resident = w0.size * w_item + b0.size * 4
    if num_rest:
        resident += wr.size * w_item + br.size * 4

    budget = int(vmem_cap * 0.85)                      # generation-aware cap
    # Grow tm with the VMEM left after the resident weights (double-buffered
    # in/out activation tiles + in-kernel f32 temporaries).
    per_row = 2 * K0p * a_item + 2 * D * a_item + 3 * D * 4
    tm_max = (budget - resident - (2 << 20)) // per_row
    tm = _pick_tm(M, min(max(tm_max, _SUBLANE), 1024))
    Mp = _round_up(M, tm)

    if (Mp, K0p) == (M, K):
        xp = x
    else:
        xp = jnp.zeros((Mp, K0p), x.dtype).at[:M, :K].set(x)

    def run(single_buffer):
        in_specs = [pl.BlockSpec((tm, K0p), lambda i: (i, 0)),
                    _resident_spec((K0p, D), single_buffer),
                    _resident_spec((1, D), single_buffer)]
        args = [xp, w0, b0]
        if num_rest:
            in_specs += [_resident_spec((num_rest, D, D), single_buffer),
                         _resident_spec((num_rest, 1, D), single_buffer)]
            args += [wr, br]
        res_mult = 1 if single_buffer else 2
        vmem_needed = (res_mult * resident
                       + 2 * tm * K0p * a_item + 2 * tm * D * a_item
                       + 3 * tm * D * 4 + (2 << 20))
        vmem_limit = int(min(max(int(vmem_needed * 1.2), 16 << 20), budget))
        return pl.pallas_call(
            _make_fused_kernel(num_rest, gelu),
            out_shape=jax.ShapeDtypeStruct((Mp, D), x.dtype),
            grid_spec=pltpu.PrefetchScalarGridSpec(
                num_scalar_prefetch=0,
                grid=(Mp // tm,),
                in_specs=in_specs,
                out_specs=pl.BlockSpec((tm, D), lambda i: (i, 0)),
            ),
            compiler_params=pltpu.CompilerParams(
                dimension_semantics=("parallel",),
                vmem_limit_bytes=vmem_limit,
            ),
        )(*args)

    try:
        out = run(single_buffer=True)
    except Exception:
        out = run(single_buffer=False)     # Buffered(1) unsupported -> default pipelining
    return out[:M, :out_dim]


def _layer_resident_forward(xp, w, b, gelu, tm, vmem_cap):
    Mp, Kp = xp.shape
    _, Np = w.shape
    a_item = np.dtype(xp.dtype).itemsize
    w_item = np.dtype(w.dtype).itemsize
    resident = w.size * w_item + b.size * 4
    budget = int(vmem_cap * 0.85)

    def run(single_buffer):
        res_mult = 1 if single_buffer else 2
        vmem_needed = (res_mult * resident + 2 * tm * Kp * a_item
                       + 2 * tm * Np * a_item + 2 * tm * Np * 4 + (2 << 20))
        vmem_limit = int(min(max(int(vmem_needed * 1.2), 16 << 20), budget))
        return pl.pallas_call(
            _make_layer_kernel(gelu),
            out_shape=jax.ShapeDtypeStruct((Mp, Np), xp.dtype),
            grid_spec=pltpu.PrefetchScalarGridSpec(
                num_scalar_prefetch=0,
                grid=(Mp // tm,),
                in_specs=[pl.BlockSpec((tm, Kp), lambda i: (i, 0)),
                          _resident_spec((Kp, Np), single_buffer),
                          _resident_spec((1, Np), single_buffer)],
                out_specs=pl.BlockSpec((tm, Np), lambda i: (i, 0)),
            ),
            compiler_params=pltpu.CompilerParams(
                dimension_semantics=("parallel",),
                vmem_limit_bytes=vmem_limit,
            ),
        )(xp, w, b)

    try:
        return run(single_buffer=True)
    except Exception:
        return run(single_buffer=False)


def _tiled_forward(xp, w, b, gelu, tm, vmem_cap, *, tn=512, tk=512):
    Mp, Kp = xp.shape
    _, Np = w.shape
    tn = min(tn, Np)
    tk = min(tk, Kp)
    a_item = np.dtype(xp.dtype).itemsize
    w_item = np.dtype(w.dtype).itemsize
    budget = int(vmem_cap * 0.85)
    vmem_needed = (2 * tm * tk * a_item + 2 * tk * tn * w_item
                   + 2 * tm * tn * a_item + tm * tn * 4 + 2 * tn * 4 + (2 << 20))
    vmem_limit = int(min(max(int(vmem_needed * 1.2), 16 << 20), budget))
    return pl.pallas_call(
        _make_tiled_kernel(gelu),
        out_shape=jax.ShapeDtypeStruct((Mp, Np), xp.dtype),
        grid_spec=pltpu.PrefetchScalarGridSpec(
            num_scalar_prefetch=0,
            grid=(Mp // tm, Np // tn, Kp // tk),
            in_specs=[pl.BlockSpec((tm, tk), lambda i, j, k: (i, k)),
                      pl.BlockSpec((tk, tn), lambda i, j, k: (k, j)),
                      pl.BlockSpec((1, tn), lambda i, j, k: (0, j))],
            out_specs=pl.BlockSpec((tm, tn), lambda i, j, k: (i, j)),
            scratch_shapes=[pltpu.VMEM((tm, tn), jnp.float32)],
        ),
        compiler_params=pltpu.CompilerParams(
            dimension_semantics=("parallel", "parallel", "arbitrary"),
            vmem_limit_bytes=vmem_limit,
        ),
    )(xp, w, b)


# -----------------------------------------------------------------------------
# Public module: prep is hoisted to __init__, __call__ is the forward pass.
# -----------------------------------------------------------------------------
class PallasMLP:
    """Sequential (Linear -> GELU -> Dropout) x num_layers as Pallas TPU kernels.

    Dropout is eval-mode identity.  Weight padding / casting / stacking happens
    ONCE here (not per forward call).  Path selection uses padded per-layer
    sizes against generation-aware VMEM budgets.
    """

    def __init__(self, params, *, matmul_dtype=jnp.bfloat16,
                 fuse_weight_budget_bytes=None, layer_weight_budget_bytes=None):
        self.vmem_cap = _vmem_capacity_bytes()
        if fuse_weight_budget_bytes is None:
            fuse_weight_budget_bytes = int(self.vmem_cap * 0.40)
        if layer_weight_budget_bytes is None:
            layer_weight_budget_bytes = int(self.vmem_cap * 0.35)

        self.matmul_dtype = matmul_dtype
        w_item = np.dtype(matmul_dtype).itemsize
        use_f32 = np.dtype(matmul_dtype) == np.dtype(jnp.float32)
        # Exact erf GELU on the f32 accuracy path; tanh (EUP) on the fast path.
        self.gelu = _gelu_exact if use_f32 else _gelu_tanh
        self.out_dim = params[-1][0].shape[1]
        in_dim = params[0][0].shape[0]
        hidden = max(w.shape[1] for (w, _) in params)
        L = len(params)

        # ---- fused path: first layer kept at its own padded K (no DxD blow-up
        # when in_dim != hidden); remaining layers stacked as (L-1, D, D). -----
        D = _round_up(hidden, _LANE)
        K0p = _round_up(in_dim, _LANE)
        fused_weight_bytes = (K0p * D + max(L - 1, 0) * D * D) * w_item
        if fused_weight_bytes <= fuse_weight_budget_bytes:
            self.mode = "fused"
            w0, b0 = params[0]
            # Padded lanes stay exactly zero through every layer: 0@0+0 -> gelu(0)=0.
            self.w0 = (jnp.zeros((K0p, D), matmul_dtype)
                       .at[:w0.shape[0], :w0.shape[1]].set(w0.astype(matmul_dtype)))
            self.b0 = (jnp.zeros((1, D), jnp.float32)
                       .at[0, :b0.shape[0]].set(b0.astype(jnp.float32)))
            if L > 1:
                wr = jnp.zeros((L - 1, D, D), matmul_dtype)
                br = jnp.zeros((L - 1, 1, D), jnp.float32)
                for l, (w, b) in enumerate(params[1:]):
                    wr = wr.at[l, :w.shape[0], :w.shape[1]].set(w.astype(matmul_dtype))
                    br = br.at[l, 0, :b.shape[0]].set(b.astype(jnp.float32))
                self.wr, self.br = wr, br
            else:
                self.wr, self.br = None, None
            return

        # ---- layerwise path --------------------------------------------------
        self.mode = "layerwise"
        # Layers too big for a resident weight use the K/N-tiled kernel
        # (tk = tn = 512), so pick one padding grain for the whole stack so
        # activations can stay in the padded layout between layers.
        need_tiled = any(
            _round_up(w.shape[0], _LANE) * _round_up(w.shape[1], _LANE) * w_item
            > layer_weight_budget_bytes for (w, _) in params)
        self.grain = 512 if need_tiled else _LANE
        self.layers = []
        for (w, b) in params:
            Kp = _round_up(w.shape[0], self.grain)
            Np = _round_up(w.shape[1], self.grain)
            kind = "tiled" if Kp * Np * w_item > layer_weight_budget_bytes else "resident"
            wp = (jnp.zeros((Kp, Np), matmul_dtype)
                  .at[:w.shape[0], :w.shape[1]].set(w.astype(matmul_dtype)))
            bp = (jnp.zeros((1, Np), jnp.float32)
                  .at[0, :b.shape[0]].set(b.astype(jnp.float32)))
            self.layers.append((kind, wp, bp))

    def __call__(self, x):
        # TODO(synk): training-mode stochastic dropout (pltpu.prng_*) not wired in;
        #             this forward reproduces eval-mode (identity) dropout only.
        if self.mode == "fused":
            return _fused_forward(x, self.w0, self.b0, self.wr, self.br,
                                  self.out_dim, self.gelu, self.vmem_cap)

        M, K = x.shape
        tm = _pick_tm(M, 512)
        Mp = _round_up(M, tm)
        K0p = self.layers[0][1].shape[0]
        if (Mp, K0p) == (M, K):
            h = x
        else:
            h = jnp.zeros((Mp, K0p), x.dtype).at[:M, :K].set(x)
        # Activations stay in the padded (Mp, Np) layout between layers
        # (padded lanes are exactly zero); slice once at the end.
        for kind, w, b in self.layers:
            if kind == "resident":
                h = _layer_resident_forward(h, w, b, self.gelu, tm, self.vmem_cap)
            else:
                h = _tiled_forward(h, w, b, self.gelu, tm, self.vmem_cap)
        return h[:M, :self.out_dim]


def init_mlp_params(key, input_size, hidden_size, num_layers, dtype=jnp.float32):
    """Deterministic init matching nn.Linear shapes (uniform +-1/sqrt(fan_in))."""
    params = []
    in_dim = input_size
    for _ in range(num_layers):
        key, kw, kb = jax.random.split(key, 3)
        bound = 1.0 / math.sqrt(in_dim)
        w = jax.random.uniform(kw, (in_dim, hidden_size), dtype, -bound, bound)
        b = jax.random.uniform(kb, (hidden_size,), dtype, -bound, bound)
        params.append((w, b))
        in_dim = hidden_size
    return params


if __name__ == "__main__":
    key = jax.random.PRNGKey(0)
    batch, input_size, hidden_size, num_layers = 8, 32, 32, 2
    dropout = 0.1  # eval-mode -> identity

    kx, kp = jax.random.split(key)
    x = jax.random.normal(kx, (batch, input_size), dtype=jnp.float32)
    params = init_mlp_params(kp, input_size, hidden_size, num_layers)

    # Plain-JAX reference: exact erf GELU, highest-precision f32 matmuls,
    # eval-mode dropout.
    ref = x
    for (w, b) in params:
        ref = jax.nn.gelu(
            jnp.dot(ref, w, precision=lax.Precision.HIGHEST) + b,
            approximate=False)

    # 1) Default fast path: fused whole-MLP, bf16 MXU inputs + f32 accumulate,
    #    tanh-approx GELU (EUP), single-buffered resident weights.
    mlp_fast = PallasMLP(params)
    out_fast = mlp_fast(x)
    jax.block_until_ready(out_fast)
    assert out_fast.shape == (batch, hidden_size)
    assert jnp.allclose(out_fast, ref, atol=5e-2, rtol=5e-2)

    # 2) Accuracy path: fused, f32 matmuls + exact erf GELU.
    #    (Tolerance is conservative to cover MXU f32 multi-pass emulation.)
    mlp_f32 = PallasMLP(params, matmul_dtype=jnp.float32)
    out_f32 = mlp_f32(x)
    jax.block_until_ready(out_f32)
    assert jnp.allclose(out_f32, ref, atol=2e-2, rtol=2e-2)

    # 3) Per-layer weight-resident path (forced), f32.
    mlp_layer = PallasMLP(params, matmul_dtype=jnp.float32,
                          fuse_weight_budget_bytes=0)
    out_layer = mlp_layer(x)
    jax.block_until_ready(out_layer)
    assert jnp.allclose(out_layer, ref, atol=2e-2, rtol=2e-2)

    # 4) K-tiled accumulator fallback (forced), f32.
    mlp_tiled = PallasMLP(params, matmul_dtype=jnp.float32,
                          fuse_weight_budget_bytes=0,
                          layer_weight_budget_bytes=0)
    out_tiled = mlp_tiled(x)
    jax.block_until_ready(out_tiled)
    assert jnp.allclose(out_tiled, ref, atol=2e-2, rtol=2e-2)

    print("KERNEL_OK")
</pallas_src>

<mosaic_0001>
module attributes {stable_mosaic.version = 11 : i64} {
  func.func @kernel(%arg0: i32, %arg1: memref<8x128xf32, #tpu.memory_space<vmem>>, %arg2: memref<128x128xbf16, #tpu.memory_space<vmem>>, %arg3: memref<1x128xf32, #tpu.memory_space<vmem>>, %arg4: memref<1x128x128xbf16, #tpu.memory_space<vmem>>, %arg5: memref<1x1x128xf32, #tpu.memory_space<vmem>>, %arg6: memref<8x128xf32, #tpu.memory_space<vmem>>) attributes {dimension_semantics = [#tpu.dimension_semantics<parallel>], iteration_bounds = array<i64: 1>, scalar_prefetch = 0 : i64, scratch_operands = 0 : i64, tpu.core_type = #tpu.core_type<tc>, window_params = [{transform_indices = @transform_0, window_bounds = array<i64: 8, 128>}, {pipeline_mode = #tpu.pipeline_mode<synchronous>, transform_indices = @transform_1, window_bounds = array<i64: 128, 128>}, {pipeline_mode = #tpu.pipeline_mode<synchronous>, transform_indices = @transform_2, window_bounds = array<i64: 1, 128>}, {pipeline_mode = #tpu.pipeline_mode<synchronous>, transform_indices = @transform_3, window_bounds = array<i64: 1, 128, 128>}, {pipeline_mode = #tpu.pipeline_mode<synchronous>, transform_indices = @transform_4, window_bounds = array<i64: 1, 1, 128>}, {transform_indices = @transform_5, window_bounds = array<i64: 8, 128>}]} {
    %c0 = arith.constant 0 : index
    %c0_0 = arith.constant 0 : index
    %0 = vector.load %arg1[%c0, %c0_0] : memref<8x128xf32, #tpu.memory_space<vmem>>, vector<8x128xf32>
    %c0_1 = arith.constant 0 : index
    %c0_2 = arith.constant 0 : index
    %1 = vector.load %arg2[%c0_1, %c0_2] : memref<128x128xbf16, #tpu.memory_space<vmem>>, vector<128x128xbf16>
    %c0_3 = arith.constant 0 : index
    %c0_4 = arith.constant 0 : index
    %2 = vector.load %arg3[%c0_3, %c0_4] : memref<1x128xf32, #tpu.memory_space<vmem>>, vector<1x128xf32>
    %3 = arith.truncf %0 : vector<8x128xf32> to vector<8x128xbf16>
    %cst = arith.constant dense<0.000000e+00> : vector<8x128xf32>
    %4 = tpu.matmul %3, %1, %cst {dimension_numbers = #tpu.dot_dimension_numbers<[1], [0], [0], [1], [0, 0, 1, 1], [], []>} : vector<8x128xbf16>, vector<128x128xbf16>, vector<8x128xf32> -> vector<8x128xf32>
    %5 = vector.broadcast %2 : vector<1x128xf32> to vector<8x128xf32>
    %6 = arith.addf %4, %5 : vector<8x128xf32>
    %cst_5 = arith.constant 5.000000e-01 : f32
    %7 = vector.broadcast %cst_5 : f32 to vector<8x128xf32>
    %8 = arith.mulf %7, %6 : vector<8x128xf32>
    %cst_6 = arith.constant 4.471500e-02 : f32
    %9 = vector.broadcast %cst_6 : f32 to vector<8x128xf32>
    %10 = arith.mulf %9, %6 : vector<8x128xf32>
    %11 = arith.mulf %10, %6 : vector<8x128xf32>
    %12 = arith.mulf %11, %6 : vector<8x128xf32>
    %13 = arith.addf %6, %12 : vector<8x128xf32>
    %cst_7 = arith.constant 0.797884583 : f32
    %14 = vector.broadcast %cst_7 : f32 to vector<8x128xf32>
    %15 = arith.mulf %14, %13 : vector<8x128xf32>
    %16 = math.tanh %15 : vector<8x128xf32>
    %cst_8 = arith.constant 1.000000e+00 : f32
    %17 = vector.broadcast %cst_8 : f32 to vector<8x128xf32>
    %18 = arith.addf %17, %16 : vector<8x128xf32>
    %19 = arith.mulf %8, %18 : vector<8x128xf32>
    %c0_9 = arith.constant 0 : index
    %c0_10 = arith.constant 0 : index
    %c0_11 = arith.constant 0 : index
    %20 = vector.load %arg4[%c0_9, %c0_10, %c0_11] : memref<1x128x128xbf16, #tpu.memory_space<vmem>>, vector<1x128x128xbf16>
    %21 = vector.shape_cast %20 : vector<1x128x128xbf16> to vector<128x128xbf16>
    %c0_12 = arith.constant 0 : index
    %c0_13 = arith.constant 0 : index
    %c0_14 = arith.constant 0 : index
    %22 = vector.load %arg5[%c0_12, %c0_13, %c0_14] : memref<1x1x128xf32, #tpu.memory_space<vmem>>, vector<1x1x128xf32>
    %23 = vector.shape_cast %22 : vector<1x1x128xf32> to vector<1x128xf32>
    %24 = arith.truncf %19 : vector<8x128xf32> to vector<8x128xbf16>
    %cst_15 = arith.constant dense<0.000000e+00> : vector<8x128xf32>
    %25 = tpu.matmul %24, %21, %cst_15 {dimension_numbers = #tpu.dot_dimension_numbers<[1], [0], [0], [1], [0, 0, 1, 1], [], []>} : vector<8x128xbf16>, vector<128x128xbf16>, vector<8x128xf32> -> vector<8x128xf32>
    %26 = vector.broadcast %23 : vector<1x128xf32> to vector<8x128xf32>
    %27 = arith.addf %25, %26 : vector<8x128xf32>
    %cst_16 = arith.constant 5.000000e-01 : f32
    %28 = vector.broadcast %cst_16 : f32 to vector<8x128xf32>
    %29 = arith.mulf %28, %27 : vector<8x128xf32>
    %cst_17 = arith.constant 4.471500e-02 : f32
    %30 = vector.broadcast %cst_17 : f32 to vector<8x128xf32>
    %31 = arith.mulf %30, %27 : vector<8x128xf32>
    %32 = arith.mulf %31, %27 : vector<8x128xf32>
    %33 = arith.mulf %32, %27 : vector<8x128xf32>
    %34 = arith.addf %27, %33 : vector<8x128xf32>
    %cst_18 = arith.constant 0.797884583 : f32
    %35 = vector.broadcast %cst_18 : f32 to vector<8x128xf32>
    %36 = arith.mulf %35, %34 : vector<8x128xf32>
    %37 = math.tanh %36 : vector<8x128xf32>
    %cst_19 = arith.constant 1.000000e+00 : f32
    %38 = vector.broadcast %cst_19 : f32 to vector<8x128xf32>
    %39 = arith.addf %38, %37 : vector<8x128xf32>
    %40 = arith.mulf %29, %39 : vector<8x128xf32>
    %c0_20 = arith.constant 0 : index
    %c0_21 = arith.constant 0 : index
    %41 = vector.load %arg6[%c0_20, %c0_21] : memref<8x128xf32, #tpu.memory_space<vmem>>, vector<8x128xf32>
    tpu.vector_store %arg6[%c0_20, %c0_21], %40 {strides = array<i32>} : memref<8x128xf32, #tpu.memory_space<vmem>>, vector<8x128xf32>,
    return
  }
  func.func @transform_0(%arg0: i32) -> (i32, i32) {
    %c0_i32 = arith.constant 0 : i32
    %c0_i32_0 = arith.constant 0 : i32
    return %arg0, %c0_i32 : i32, i32
  }
  func.func @transform_1(%arg0: i32) -> (i32, i32) {
    %c0_i32 = arith.constant 0 : i32
    %c0_i32_0 = arith.constant 0 : i32
    %c0_i32_1 = arith.constant 0 : i32
    return %c0_i32, %c0_i32_0 : i32, i32
  }
  func.func @transform_2(%arg0: i32) -> (i32, i32) {
    %c0_i32 = arith.constant 0 : i32
    %c0_i32_0 = arith.constant 0 : i32
    %c0_i32_1 = arith.constant 0 : i32
    return %c0_i32, %c0_i32_0 : i32, i32
  }
  func.func @transform_3(%arg0: i32) -> (i32, i32, i32) {
    %c0_i32 = arith.constant 0 : i32
    %c0_i32_0 = arith.constant 0 : i32
    %c0_i32_1 = arith.constant 0 : i32
    %c0_i32_2 = arith.constant 0 : i32
    return %c0_i32, %c0_i32_0, %c0_i32_1 : i32, i32, i32
  }
  func.func @transform_4(%arg0: i32) -> (i32, i32, i32) {
    %c0_i32 = arith.constant 0 : i32
    %c0_i32_0 = arith.constant 0 : i32
    %c0_i32_1 = arith.constant 0 : i32
    %c0_i32_2 = arith.constant 0 : i32
    return %c0_i32, %c0_i32_0, %c0_i32_1 : i32, i32, i32
  }
  func.func @transform_5(%arg0: i32) -> (i32, i32) {
    %c0_i32 = arith.constant 0 : i32
    %c0_i32_0 = arith.constant 0 : i32
    return %arg0, %c0_i32 : i32, i32
  }
}

module attributes {stable_mosaic.version = 11 : i64} {
  func.func @kernel(%arg0: i32, %arg1: memref<8x128xf32, #tpu.memory_space<vmem>>, %arg2: memref<128x128xbf16, #tpu.memory_space<vmem>>, %arg3: memref<1x128xf32, #tpu.memory_space<vmem>>, %arg4: memref<1x128x128xbf16, #tpu.memory_space<vmem>>, %arg5: memref<1x1x128xf32, #tpu.memory_space<vmem>>, %arg6: memref<8x128xf32, #tpu.memory_space<vmem>>) attributes {dimension_semantics = [#tpu.dimension_semantics<parallel>], iteration_bounds = array<i64: 1>, scalar_prefetch = 0 : i64, scratch_operands = 0 : i64, tpu.core_type = #tpu.core_type<tc>, window_params = [{transform_indices = @transform_0, window_bounds = array<i64: 8, 128>}, {pipeline_mode = #tpu.pipeline_mode<synchronous>, transform_indices = @transform_1, window_bounds = array<i64: 128, 128>}, {pipeline_mode = #tpu.pipeline_mode<synchronous>, transform_indices = @transform_2, window_bounds = array<i64: 1, 128>}, {pipeline_mode = #tpu.pipeline_mode<synchronous>, transform_indices = @transform_3, window_bounds = array<i64: 1, 128, 128>}, {pipeline_mode = #tpu.pipeline_mode<synchronous>, transform_indices = @transform_4, window_bounds = array<i64: 1, 1, 128>}, {transform_indices = @transform_5, window_bounds = array<i64: 8, 128>}]} {
    %c0 = arith.constant 0 : index
    %c0_0 = arith.constant 0 : index
    %0 = vector.load %arg1[%c0, %c0_0] : memref<8x128xf32, #tpu.memory_space<vmem>>, vector<8x128xf32>
    %c0_1 = arith.constant 0 : index
    %c0_2 = arith.constant 0 : index
    %1 = vector.load %arg2[%c0_1, %c0_2] : memref<128x128xbf16, #tpu.memory_space<vmem>>, vector<128x128xbf16>
    %c0_3 = arith.constant 0 : index
    %c0_4 = arith.constant 0 : index
    %2 = vector.load %arg3[%c0_3, %c0_4] : memref<1x128xf32, #tpu.memory_space<vmem>>, vector<1x128xf32>
    %3 = arith.truncf %0 : vector<8x128xf32> to vector<8x128xbf16>
    %cst = arith.constant dense<0.000000e+00> : vector<8x128xf32>
    %4 = tpu.matmul %3, %1, %cst {dimension_numbers = #tpu.dot_dimension_numbers<[1], [0], [0], [1], [0, 0, 1, 1], [], []>} : vector<8x128xbf16>, vector<128x128xbf16>, vector<8x128xf32> -> vector<8x128xf32>
    %5 = vector.broadcast %2 : vector<1x128xf32> to vector<8x128xf32>
    %6 = arith.addf %4, %5 : vector<8x128xf32>
    %cst_5 = arith.constant 5.000000e-01 : f32
    %7 = vector.broadcast %cst_5 : f32 to vector<8x128xf32>
    %8 = arith.mulf %7, %6 : vector<8x128xf32>
    %cst_6 = arith.constant 4.471500e-02 : f32
    %9 = vector.broadcast %cst_6 : f32 to vector<8x128xf32>
    %10 = arith.mulf %9, %6 : vector<8x128xf32>
    %11 = arith.mulf %10, %6 : vector<8x128xf32>
    %12 = arith.mulf %11, %6 : vector<8x128xf32>
    %13 = arith.addf %6, %12 : vector<8x128xf32>
    %cst_7 = arith.constant 0.797884583 : f32
    %14 = vector.broadcast %cst_7 : f32 to vector<8x128xf32>
    %15 = arith.mulf %14, %13 : vector<8x128xf32>
    %16 = math.tanh %15 : vector<8x128xf32>
    %cst_8 = arith.constant 1.000000e+00 : f32
    %17 = vector.broadcast %cst_8 : f32 to vector<8x128xf32>
    %18 = arith.addf %17, %16 : vector<8x128xf32>
    %19 = arith.mulf %8, %18 : vector<8x128xf32>
    %c0_9 = arith.constant 0 : index
    %c0_10 = arith.constant 0 : index
    %c0_11 = arith.constant 0 : index
    %20 = vector.load %arg4[%c0_9, %c0_10, %c0_11] : memref<1x128x128xbf16, #tpu.memory_space<vmem>>, vector<1x128x128xbf16>
    %21 = vector.shape_cast %20 : vector<1x128x128xbf16> to vector<128x128xbf16>
    %c0_12 = arith.constant 0 : index
    %c0_13 = arith.constant 0 : index
    %c0_14 = arith.constant 0 : index
    %22 = vector.load %arg5[%c0_12, %c0_13, %c0_14] : memref<1x1x128xf32, #tpu.memory_space<vmem>>, vector<1x1x128xf32>
    %23 = vector.shape_cast %22 : vector<1x1x128xf32> to vector<1x128xf32>
    %24 = arith.truncf %19 : vector<8x128xf32> to vector<8x128xbf16>
    %cst_15 = arith.constant dense<0.000000e+00> : vector<8x128xf32>
    %25 = tpu.matmul %24, %21, %cst_15 {dimension_numbers = #tpu.dot_dimension_numbers<[1], [0], [0], [1], [0, 0, 1, 1], [], []>} : vector<8x128xbf16>, vector<128x128xbf16>, vector<8x128xf32> -> vector<8x128xf32>
    %26 = vector.broadcast %23 : vector<1x128xf32> to vector<8x128xf32>
    %27 = arith.addf %25, %26 : vector<8x128xf32>
    %cst_16 = arith.constant 5.000000e-01 : f32
    %28 = vector.broadcast %cst_16 : f32 to vector<8x128xf32>
    %29 = arith.mulf %28, %27 : vector<8x128xf32>
    %cst_17 = arith.constant 4.471500e-02 : f32
    %30 = vector.broadcast %cst_17 : f32 to vector<8x128xf32>
    %31 = arith.mulf %30, %27 : vector<8x128xf32>
    %32 = arith.mulf %31, %27 : vector<8x128xf32>
    %33 = arith.mulf %32, %27 : vector<8x128xf32>
    %34 = arith.addf %27, %33 : vector<8x128xf32>
    %cst_18 = arith.constant 0.797884583 : f32
    %35 = vector.broadcast %cst_18 : f32 to vector<8x128xf32>
    %36 = arith.mulf %35, %34 : vector<8x128xf32>
    %37 = math.tanh %36 : vector<8x128xf32>
    %cst_19 = arith.constant 1.000000e+00 : f32
    %38 = vector.broadcast %cst_19 : f32 to vector<8x128xf32>
    %39 = arith.addf %38, %37 : vector<8x128xf32>
    %40 = arith.mulf %29, %39 : vector<8x128xf32>
    %c0_20 = arith.constant 0 : index
    %c0_21 = arith.constant 0 : index
    %41 = vector.load %arg6[%c0_20, %c0_21] : memref<8x128xf32, #tpu.memory_space<vmem>>, vector<8x128xf32>
    tpu.vector_store %arg6[%c0_20, %c0_21], %40 {strides = array<i32>} : memref<8x128xf32, #tpu.memory_space<vmem>>, vector<8x128xf32>,
    return
  }
  func.func @transform_0(%arg0: i32) -> (i32, i32) {
    %c0_i32 = arith.constant 0 : i32
    %c0_i32_0 = arith.constant 0 : i32
    return %arg0, %c0_i32 : i32, i32
  }
  func.func @transform_1(%arg0: i32) -> (i32, i32) {
    %c0_i32 = arith.constant 0 : i32
    %c0_i32_0 = arith.constant 0 : i32
    %c0_i32_1 = arith.constant 0 : i32
    return %c0_i32, %c0_i32_0 : i32, i32
  }
  func.func @transform_2(%arg0: i32) -> (i32, i32) {
    %c0_i32 = arith.constant 0 : i32
    %c0_i32_0 = arith.constant 0 : i32
    %c0_i32_1 = arith.constant 0 : i32
    return %c0_i32, %c0_i32_0 : i32, i32
  }
  func.func @transform_3(%arg0: i32) -> (i32, i32, i32) {
    %c0_i32 = arith.constant 0 : i32
    %c0_i32_0 = arith.constant 0 : i32
    %c0_i32_1 = arith.constant 0 : i32
    %c0_i32_2 = arith.constant 0 : i32
    return %c0_i32, %c0_i32_0, %c0_i32_1 : i32, i32, i32
  }
  func.func @transform_4(%arg0: i32) -> (i32, i32, i32) {
    %c0_i32 = arith.constant 0 : i32
    %c0_i32_0 = arith.constant 0 : i32
    %c0_i32_1 = arith.constant 0 : i32
    %c0_i32_2 = arith.constant 0 : i32
    return %c0_i32, %c0_i32_0, %c0_i32_1 : i32, i32, i32
  }
  func.func @transform_5(%arg0: i32) -> (i32, i32) {
    %c0_i32 = arith.constant 0 : i32
    %c0_i32_0 = arith.constant 0 : i32
    return %arg0, %c0_i32 : i32, i32
  }
}

</mosaic_0001>

<llo_original>
// kernel: tpu_custom_call.1
$region0: #{tpu_custom_call.1}
  #allocation0 [shape = 'u32[]', space=smem, size = 0x4, offset = 0x4, fixed_abs, tag = 'smem constant byte address 0x4 - core index']
  #allocation1 [shape = 'u32[72,128]{1,0:T(1,128)}', space=vmem, size = 0x9000, scoped, tag = 'internal scratch']
  %s0 = inlined_call_operand.hbm [shape: f32[8,128], index: 0, kind: input, shape index: {}]
  %s1 = inlined_call_operand.hbm [shape: bf16[128,128], index: 1, kind: input, shape index: {}]
  %s2 = inlined_call_operand.vmem [shape: f32[1,128], index: 2, kind: input, shape index: {}]
  %s3 = inlined_call_operand.hbm [shape: bf16[1,128,128], index: 3, kind: input, shape index: {}]
  %s4 = inlined_call_operand.vmem [shape: f32[1,1,128], index: 4, kind: input, shape index: {}]
  %s5 = inlined_call_operand.hbm [shape: f32[8,128], index: 5, kind: output, shape index: {}]
  %s6 = sld [smem:[#allocation0]]
  $region42: #{tpu_custom_call.1} parent=0
    _
  %s8 = ssub.s32 1, %s6
  %s9 = scalar_select 0, %s8, %s6
  $region1: #{tpu_custom_call.1} parent=0
    #allocation2 [shape = 'u8[4096]{0}', space=vmem, size = 0x1000, scoped, tag = 'input window, operand 0, single buffered']
    #allocation3 [shape = 's32[1]{0}', space=sflag, size = 0x4, scoped, tag = 'scoped memory for tpu_custom_call.1']
    #allocation4 [shape = 's32[1]{0}', space=sflag, size = 0x4, scoped, tag = 'scoped memory for tpu_custom_call.1']
    #allocation5 [shape = 'u8[32768]{0}', space=vmem, size = 0x8000, scoped, tag = 'input window, operand 1, single buffered']
    #allocation6 [shape = 's32[1]{0}', space=sflag, size = 0x4, scoped, tag = 'scoped memory for tpu_custom_call.1']
    #allocation7 [shape = 'u8[32768]{0}', space=vmem, size = 0x8000, scoped, tag = 'input window, operand 3, single buffered']
    #allocation8 [shape = 'u8[4096]{0}', space=vmem, size = 0x1000, scoped, tag = 'output window, operand 0, single buffered']
    %10 = vsyncpa [#allocation3], 0
    %11 = vsyncpa [#allocation6], 0
    %12 = vsyncpa [#allocation4], 0
    // Predicated region
    $region2: #{tpu_custom_call.1} parent=1 // pred_check
      _
    $region3: #{tpu_custom_call.1} parent=1 // pred_check_branch
      %14 = sbr.rel (0) target = $region5
    $region4: #{tpu_custom_call.1} parent=1 // pred_region
      %16 = vsyncadd [#allocation3], 0
      %s18 = sshll.u32 %s0, 4
      %s19 = int_to_ptr.hbm [resolvable:$true] %s18
      %s20 = sshll.u32 [#allocation2], 4
      %s21 = int_to_ptr.vmem [resolvable:$true] %s20
      %23 = dma.hbm_to_vmem [thread:$0]  %s19, 128, %s21, [#allocation3]
    $region5: #{tpu_custom_call.1} parent=1 // pred_fallthru
      _
    // Predicated region
    $region6: #{tpu_custom_call.1} parent=1 // pred_check
      _
    $region7: #{tpu_custom_call.1} parent=1 // pred_check_branch
      %25 = sbr.rel (0) target = $region9
    $region8: #{tpu_custom_call.1} parent=1 // pred_region
      %27 = vsyncadd [#allocation6], 0
      %s28 = sshll.u32 %s1, 4
      %s29 = int_to_ptr.hbm [resolvable:$true] %s28
      %s30 = sshll.u32 [#allocation5], 4
      %s31 = int_to_ptr.vmem [resolvable:$true] %s30
      %36 = dma.hbm_to_vmem [thread:$0]  %s29, 1024, %s31, [#allocation6], 64, 64, 4
    $region9: #{tpu_custom_call.1} parent=1 // pred_fallthru
      _
    // Predicated region
    $region10: #{tpu_custom_call.1} parent=1 // pred_check
      _
    $region11: #{tpu_custom_call.1} parent=1 // pred_check_branch
      %38 = sbr.rel (0) target = $region13
    $region12: #{tpu_custom_call.1} parent=1 // pred_region
      _
    $region13: #{tpu_custom_call.1} parent=1 // pred_fallthru
      _
    // Predicated region
    $region14: #{tpu_custom_call.1} parent=1 // pred_check
      _
    $region15: #{tpu_custom_call.1} parent=1 // pred_check_branch
      %40 = sbr.rel (0) target = $region17
    $region16: #{tpu_custom_call.1} parent=1 // pred_region
      %42 = vsyncadd [#allocation6], 0
      %s43 = sshll.u32 %s3, 4
      %s44 = int_to_ptr.hbm [resolvable:$true] %s43
      %s45 = sshll.u32 [#allocation7], 4
      %s46 = int_to_ptr.vmem [resolvable:$true] %s45
      %51 = dma.hbm_to_vmem [thread:$0]  %s44, 1024, %s46, [#allocation6], 64, 64, 4
    $region17: #{tpu_custom_call.1} parent=1 // pred_fallthru
      _
    // Predicated region
    $region18: #{tpu_custom_call.1} parent=1 // pred_check
      _
    $region19: #{tpu_custom_call.1} parent=1 // pred_check_branch
      %53 = sbr.rel (0) target = $region21
    $region20: #{tpu_custom_call.1} parent=1 // pred_region
      _
    $region21: #{tpu_custom_call.1} parent=1 // pred_fallthru
      _
    // Predicated region
    $region22: #{tpu_custom_call.1} parent=1 // pred_check
      _
    $region23: #{tpu_custom_call.1} parent=1 // pred_check_branch
      %55 = sbr.rel (0) target = $region25
    $region24: #{tpu_custom_call.1} parent=1 // pred_region
      %57 = dma.done [#allocation3], 128
    $region25: #{tpu_custom_call.1} parent=1 // pred_fallthru
      _
    // Predicated region
    $region26: #{tpu_custom_call.1} parent=1 // pred_check
      _
    $region27: #{tpu_custom_call.1} parent=1 // pred_check_branch
      %59 = sbr.rel (0) target = $region29
    $region28: #{tpu_custom_call.1} parent=1 // pred_region
      %61 = dma.done [#allocation6], 1024
    $region29: #{tpu_custom_call.1} parent=1 // pred_fallthru
      _
    // Predicated region
    $region30: #{tpu_custom_call.1} parent=1 // pred_check
      _
    $region31: #{tpu_custom_call.1} parent=1 // pred_check_branch
      %63 = sbr.rel (0) target = $region33
    $region32: #{tpu_custom_call.1} parent=1 // pred_region
      %65 = dma.done [#allocation6], 1024
    $region33: #{tpu_custom_call.1} parent=1 // pred_fallthru
      _
    %v66 = vld [vmem:[#allocation2] sm:$0xff]
    %v67 = vld [vmem:[#allocation5] sm:$0xf]
    %v68 = vld [vmem:[#allocation5 + $0x4] sm:$0xf]
    %v69 = vld [vmem:[#allocation5 + $0x8] sm:$0xf]
    %v70 = vld [vmem:[#allocation5 + $0xc] sm:$0xf]
    %v71 = vld [vmem:[#allocation5 + $0x10] sm:$0xf]
    %v72 = vld [vmem:[#allocation5 + $0x14] sm:$0xf]
    %v73 = vld [vmem:[#allocation5 + $0x18] sm:$0xf]
    %v74 = vld [vmem:[#allocation5 + $0x1c] sm:$0xf]
    %v75 = vld [vmem:[#allocation5 + $0x20] sm:$0xf]
    %v76 = vld [vmem:[#allocation5 + $0x24] sm:$0xf]
    %v77 = vld [vmem:[#allocation5 + $0x28] sm:$0xf]
    %v78 = vld [vmem:[#allocation5 + $0x2c] sm:$0xf]
    %v79 = vld [vmem:[#allocation5 + $0x30] sm:$0xf]
    %v80 = vld [vmem:[#allocation5 + $0x34] sm:$0xf]
    %v81 = vld [vmem:[#allocation5 + $0x38] sm:$0xf]
    %v82 = vld [vmem:[#allocation5 + $0x3c] sm:$0xf]
    %v83 = vld [vmem:[%s2] sm:$0x1]
    %v84 = vpack.c.bf16 %v66, %v66
    %v86 = vperm.slane %v83, 0
    %v104 = vunpack.c.l.b16 %v67
    %v105 = vunpack.c.l.b16 %v68
    %v106 = vunpack.c.l.b16 %v69
    %v107 = vunpack.c.l.b16 %v70
    %v108 = vunpack.c.l.b16 %v71
    %v109 = vunpack.c.l.b16 %v72
    %v110 = vunpack.c.l.b16 %v73
    %v111 = vunpack.c.l.b16 %v74
    %v112 = vunpack.c.l.b16 %v75
    %v113 = vunpack.c.l.b16 %v76
    %v114 = vunpack.c.l.b16 %v77
    %v115 = vunpack.c.l.b16 %v78
    %v116 = vunpack.c.l.b16 %v79
    %v117 = vunpack.c.l.b16 %v80
    %v118 = vunpack.c.l.b16 %v81
    %v119 = vunpack.c.l.b16 %v82
    %v120 = vpack.c.b16 %v105, %v104
    %v121 = vpack.c.b16 %v107, %v106
    %v122 = vpack.c.b16 %v109, %v108
    %v123 = vpack.c.b16 %v111, %v110
    %v124 = vpack.c.b16 %v113, %v112
    %v125 = vpack.c.b16 %v115, %v114
    %v126 = vpack.c.b16 %v117, %v116
    %v127 = vpack.c.b16 %v119, %v118
    %136 = vmatpush.bf16.msra.mxu0 %v127
    %137 = vmatpush.bf16.msra.mxu0 %v126
    %138 = vmatpush.bf16.msra.mxu0 %v125
    %139 = vmatpush.bf16.msra.mxu0 %v124
    %140 = vmatpush.bf16.msra.mxu0 %v123
    %141 = vmatpush.bf16.msra.mxu0 %v122
    %142 = vmatpush.bf16.msra.mxu0 %v121
    %143 = vmatpush.bf16.msra.mxu0 %v120
    %144 = vmatmul.bf16.gmra.mxu0 %v84
    %v145 = vpop.f32.mrf.mxu0
    %v146 = vadd.f32 %v86, %v145
    %v147 = vpop.f32.mrf.mxu0
    %148 = vdwg.mxu0
    %v149 = vmul.f32 %v146, 0.5
    %v150 = vmul.f32 %v146, 0.044715
    %v151 = vmul.f32 %v150, %v146
    %v152 = vmul.f32 %v151, %v146
    %v153 = vadd.f32 %v146, %v152
    %v154 = vmul.f32 %v153, 0.7978846
    %v155 = vtanh.pop %v154
    %v156 = vadd.f32 %v155, 1.0
    %v157 = vmul.f32 %v149, %v156
    %v158 = vld [vmem:[#allocation7] sm:$0xf]
    %v159 = vld [vmem:[#allocation7 + $0x4] sm:$0xf]
    %v160 = vld [vmem:[#allocation7 + $0x8] sm:$0xf]
    %v161 = vld [vmem:[#allocation7 + $0xc] sm:$0xf]
    %v162 = vld [vmem:[#allocation7 + $0x10] sm:$0xf]
    %v163 = vld [vmem:[#allocation7 + $0x14] sm:$0xf]
    %v164 = vld [vmem:[#allocation7 + $0x18] sm:$0xf]
    %v165 = vld [vmem:[#allocation7 + $0x1c] sm:$0xf]
    %v166 = vld [vmem:[#allocation7 + $0x20] sm:$0xf]
    %v167 = vld [vmem:[#allocation7 + $0x24] sm:$0xf]
    %v168 = vld [vmem:[#allocation7 + $0x28] sm:$0xf]
    %v169 = vld [vmem:[#allocation7 + $0x2c] sm:$0xf]
    %v170 = vld [vmem:[#allocation7 + $0x30] sm:$0xf]
    %v171 = vld [vmem:[#allocation7 + $0x34] sm:$0xf]
    %v172 = vld [vmem:[#allocation7 + $0x38] sm:$0xf]
    %v173 = vld [vmem:[#allocation7 + $0x3c] sm:$0xf]
    %v174 = vld [vmem:[%s4] sm:$0x1]
    %v175 = vpack.c.bf16 %v157, %v157
    %v177 = vperm.slane %v174, 0
    %v195 = vunpack.c.l.b16 %v158
    %v196 = vunpack.c.l.b16 %v159
    %v197 = vunpack.c.l.b16 %v160
    %v198 = vunpack.c.l.b16 %v161
    %v199 = vunpack.c.l.b16 %v162
    %v200 = vunpack.c.l.b16 %v163
    %v201 = vunpack.c.l.b16 %v164
    %v202 = vunpack.c.l.b16 %v165
    %v203 = vunpack.c.l.b16 %v166
    %v204 = vunpack.c.l.b16 %v167
    %v205 = vunpack.c.l.b16 %v168
    %v206 = vunpack.c.l.b16 %v169
    %v207 = vunpack.c.l.b16 %v170
    %v208 = vunpack.c.l.b16 %v171
    %v209 = vunpack.c.l.b16 %v172
    %v210 = vunpack.c.l.b16 %v173
    %v211 = vpack.c.b16 %v196, %v195
    %v212 = vpack.c.b16 %v198, %v197
    %v213 = vpack.c.b16 %v200, %v199
    %v214 = vpack.c.b16 %v202, %v201
    %v215 = vpack.c.b16 %v204, %v203
    %v216 = vpack.c.b16 %v206, %v205
    %v217 = vpack.c.b16 %v208, %v207
    %v218 = vpack.c.b16 %v210, %v209
    %227 = vmatpush.bf16.msra.mxu0 %v218
    %228 = vmatpush.bf16.msra.mxu0 %v217
    %229 = vmatpush.bf16.msra.mxu0 %v216
    %230 = vmatpush.bf16.msra.mxu0 %v215
    %231 = vmatpush.bf16.msra.mxu0 %v214
    %232 = vmatpush.bf16.msra.mxu0 %v213
    %233 = vmatpush.bf16.msra.mxu0 %v212
    %234 = vmatpush.bf16.msra.mxu0 %v211
    %235 = vmatmul.bf16.gmra.mxu0 %v175
    %v236 = vpop.f32.mrf.mxu0
    %v237 = vadd.f32 %v177, %v236
    %v238 = vpop.f32.mrf.mxu0
    %239 = vdwg.mxu0
    %v240 = vmul.f32 %v237, 0.5
    %v241 = vmul.f32 %v237, 0.044715
    %v242 = vmul.f32 %v241, %v237
    %v243 = vmul.f32 %v242, %v237
    %v244 = vadd.f32 %v237, %v243
    %v245 = vmul.f32 %v244, 0.7978846
    %v246 = vtanh.pop %v245
    %v247 = vadd.f32 %v246, 1.0
    %v248 = vmul.f32 %v240, %v247
    %249 = vst [vmem:[#allocation8] sm:$0xff] %v248
    // Predicated region
    $region34: #{tpu_custom_call.1} parent=1 // pred_check
      _
    $region35: #{tpu_custom_call.1} parent=1 // pred_check_branch
      %251 = sbr.rel (0) target = $region37
    $region36: #{tpu_custom_call.1} parent=1 // pred_region
      %253 = vsyncadd [#allocation4], 0
      %s255 = sshll.u32 [#allocation8], 4
      %s256 = int_to_ptr.vmem [resolvable:$true] %s255
      %s257 = sshll.u32 %s5, 4
      %s258 = int_to_ptr.hbm [resolvable:$true] %s257
      %260 = dma.vmem_to_hbm [thread:$0]  %s256, 128, %s258, [#allocation4]
    $region37: #{tpu_custom_call.1} parent=1 // pred_fallthru
      _
    // Predicated region
    $region38: #{tpu_custom_call.1} parent=1 // pred_check
      _
    $region39: #{tpu_custom_call.1} parent=1 // pred_check_branch
      %262 = sbr.rel (0) target = $region41
    $region40: #{tpu_custom_call.1} parent=1 // pred_region
      %264 = dma.done [#allocation4], 128
    $region41: #{tpu_custom_call.1} parent=1 // pred_fallthru
      _
    %265 = vsyncpa [#allocation3], 1
    %266 = vsyncpa [#allocation6], 1
    %267 = vsyncpa [#allocation4], 1

// kernel: tpu_custom_call.1
$region0: #{tpu_custom_call.1}
  #allocation0 [shape = 'u32[]', space=smem, size = 0x4, offset = 0x4, fixed_abs, tag = 'smem constant byte address 0x4 - core index']
  #allocation1 [shape = 'u32[72,128]{1,0:T(1,128)}', space=vmem, size = 0x9000, scoped, tag = 'internal scratch']
  %s0 = inlined_call_operand.hbm [shape: f32[8,128], index: 0, kind: input, shape index: {}]
  %s1 = inlined_call_operand.hbm [shape: bf16[128,128], index: 1, kind: input, shape index: {}]
  %s2 = inlined_call_operand.vmem [shape: f32[1,128], index: 2, kind: input, shape index: {}]
  %s3 = inlined_call_operand.hbm [shape: bf16[1,128,128], index: 3, kind: input, shape index: {}]
  %s4 = inlined_call_operand.vmem [shape: f32[1,1,128], index: 4, kind: input, shape index: {}]
  %s5 = inlined_call_operand.hbm [shape: f32[8,128], index: 5, kind: output, shape index: {}]
  %s6 = sld [smem:[#allocation0]]
  $region42: #{tpu_custom_call.1} parent=0
    _
  %s8 = ssub.s32 1, %s6
  %s9 = scalar_select 0, %s8, %s6
  $region1: #{tpu_custom_call.1} parent=0
    #allocation2 [shape = 'u8[4096]{0}', space=vmem, size = 0x1000, scoped, tag = 'input window, operand 0, single buffered']
    #allocation3 [shape = 's32[1]{0}', space=sflag, size = 0x4, scoped, tag = 'scoped memory for tpu_custom_call.1']
    #allocation4 [shape = 's32[1]{0}', space=sflag, size = 0x4, scoped, tag = 'scoped memory for tpu_custom_call.1']
    #allocation5 [shape = 'u8[32768]{0}', space=vmem, size = 0x8000, scoped, tag = 'input window, operand 1, single buffered']
    #allocation6 [shape = 's32[1]{0}', space=sflag, size = 0x4, scoped, tag = 'scoped memory for tpu_custom_call.1']
    #allocation7 [shape = 'u8[32768]{0}', space=vmem, size = 0x8000, scoped, tag = 'input window, operand 3, single buffered']
    #allocation8 [shape = 'u8[4096]{0}', space=vmem, size = 0x1000, scoped, tag = 'output window, operand 0, single buffered']
    %10 = vsyncpa [#allocation3], 0
    %11 = vsyncpa [#allocation6], 0
    %12 = vsyncpa [#allocation4], 0
    // Predicated region
    $region2: #{tpu_custom_call.1} parent=1 // pred_check
      _
    $region3: #{tpu_custom_call.1} parent=1 // pred_check_branch
      %14 = sbr.rel (0) target = $region5
    $region4: #{tpu_custom_call.1} parent=1 // pred_region
      %16 = vsyncadd [#allocation3], 0
      %s18 = sshll.u32 %s0, 4
      %s19 = int_to_ptr.hbm [resolvable:$true] %s18
      %s20 = sshll.u32 [#allocation2], 4
      %s21 = int_to_ptr.vmem [resolvable:$true] %s20
      %23 = dma.hbm_to_vmem [thread:$0]  %s19, 128, %s21, [#allocation3]
    $region5: #{tpu_custom_call.1} parent=1 // pred_fallthru
      _
    // Predicated region
    $region6: #{tpu_custom_call.1} parent=1 // pred_check
      _
    $region7: #{tpu_custom_call.1} parent=1 // pred_check_branch
      %25 = sbr.rel (0) target = $region9
    $region8: #{tpu_custom_call.1} parent=1 // pred_region
      %27 = vsyncadd [#allocation6], 0
      %s28 = sshll.u32 %s1, 4
      %s29 = int_to_ptr.hbm [resolvable:$true] %s28
      %s30 = sshll.u32 [#allocation5], 4
      %s31 = int_to_ptr.vmem [resolvable:$true] %s30
      %36 = dma.hbm_to_vmem [thread:$0]  %s29, 1024, %s31, [#allocation6], 64, 64, 4
    $region9: #{tpu_custom_call.1} parent=1 // pred_fallthru
      _
    // Predicated region
    $region10: #{tpu_custom_call.1} parent=1 // pred_check
      _
    $region11: #{tpu_custom_call.1} parent=1 // pred_check_branch
      %38 = sbr.rel (0) target = $region13
    $region12: #{tpu_custom_call.1} parent=1 // pred_region
      _
    $region13: #{tpu_custom_call.1} parent=1 // pred_fallthru
      _
    // Predicated region
    $region14: #{tpu_custom_call.1} parent=1 // pred_check
      _
    $region15: #{tpu_custom_call.1} parent=1 // pred_check_branch
      %40 = sbr.rel (0) target = $region17
    $region16: #{tpu_custom_call.1} parent=1 // pred_region
      %42 = vsyncadd [#allocation6], 0
      %s43 = sshll.u32 %s3, 4
      %s44 = int_to_ptr.hbm [resolvable:$true] %s43
      %s45 = sshll.u32 [#allocation7], 4
      %s46 = int_to_ptr.vmem [resolvable:$true] %s45
      %51 = dma.hbm_to_vmem [thread:$0]  %s44, 1024, %s46, [#allocation6], 64, 64, 4
    $region17: #{tpu_custom_call.1} parent=1 // pred_fallthru
      _
    // Predicated region
    $region18: #{tpu_custom_call.1} parent=1 // pred_check
      _
    $region19: #{tpu_custom_call.1} parent=1 // pred_check_branch
      %53 = sbr.rel (0) target = $region21
    $region20: #{tpu_custom_call.1} parent=1 // pred_region
      _
    $region21: #{tpu_custom_call.1} parent=1 // pred_fallthru
      _
    // Predicated region
    $region22: #{tpu_custom_call.1} parent=1 // pred_check
      _
    $region23: #{tpu_custom_call.1} parent=1 // pred_check_branch
      %55 = sbr.rel (0) target = $region25
    $region24: #{tpu_custom_call.1} parent=1 // pred_region
      %57 = dma.done [#allocation3], 128
    $region25: #{tpu_custom_call.1} parent=1 // pred_fallthru
      _
    // Predicated region
    $region26: #{tpu_custom_call.1} parent=1 // pred_check
      _
    $region27: #{tpu_custom_call.1} parent=1 // pred_check_branch
      %59 = sbr.rel (0) target = $region29
    $region28: #{tpu_custom_call.1} parent=1 // pred_region
      %61 = dma.done [#allocation6], 1024
    $region29: #{tpu_custom_call.1} parent=1 // pred_fallthru
      _
    // Predicated region
    $region30: #{tpu_custom_call.1} parent=1 // pred_check
      _
    $region31: #{tpu_custom_call.1} parent=1 // pred_check_branch
      %63 = sbr.rel (0) target = $region33
    $region32: #{tpu_custom_call.1} parent=1 // pred_region
      %65 = dma.done [#allocation6], 1024
    $region33: #{tpu_custom_call.1} parent=1 // pred_fallthru
      _
    %v66 = vld [vmem:[#allocation2] sm:$0xff]
    %v67 = vld [vmem:[#allocation5] sm:$0xf]
    %v68 = vld [vmem:[#allocation5 + $0x4] sm:$0xf]
    %v69 = vld [vmem:[#allocation5 + $0x8] sm:$0xf]
    %v70 = vld [vmem:[#allocation5 + $0xc] sm:$0xf]
    %v71 = vld [vmem:[#allocation5 + $0x10] sm:$0xf]
    %v72 = vld [vmem:[#allocation5 + $0x14] sm:$0xf]
    %v73 = vld [vmem:[#allocation5 + $0x18] sm:$0xf]
    %v74 = vld [vmem:[#allocation5 + $0x1c] sm:$0xf]
    %v75 = vld [vmem:[#allocation5 + $0x20] sm:$0xf]
    %v76 = vld [vmem:[#allocation5 + $0x24] sm:$0xf]
    %v77 = vld [vmem:[#allocation5 + $0x28] sm:$0xf]
    %v78 = vld [vmem:[#allocation5 + $0x2c] sm:$0xf]
    %v79 = vld [vmem:[#allocation5 + $0x30] sm:$0xf]
    %v80 = vld [vmem:[#allocation5 + $0x34] sm:$0xf]
    %v81 = vld [vmem:[#allocation5 + $0x38] sm:$0xf]
    %v82 = vld [vmem:[#allocation5 + $0x3c] sm:$0xf]
    %v83 = vld [vmem:[%s2] sm:$0x1]
    %v84 = vpack.c.bf16 %v66, %v66
    %v86 = vperm.slane %v83, 0
    %v104 = vunpack.c.l.b16 %v67
    %v105 = vunpack.c.l.b16 %v68
    %v106 = vunpack.c.l.b16 %v69
    %v107 = vunpack.c.l.b16 %v70
    %v108 = vunpack.c.l.b16 %v71
    %v109 = vunpack.c.l.b16 %v72
    %v110 = vunpack.c.l.b16 %v73
    %v111 = vunpack.c.l.b16 %v74
    %v112 = vunpack.c.l.b16 %v75
    %v113 = vunpack.c.l.b16 %v76
    %v114 = vunpack.c.l.b16 %v77
    %v115 = vunpack.c.l.b16 %v78
    %v116 = vunpack.c.l.b16 %v79
    %v117 = vunpack.c.l.b16 %v80
    %v118 = vunpack.c.l.b16 %v81
    %v119 = vunpack.c.l.b16 %v82
    %v120 = vpack.c.b16 %v105, %v104
    %v121 = vpack.c.b16 %v107, %v106
    %v122 = vpack.c.b16 %v109, %v108
    %v123 = vpack.c.b16 %v111, %v110
    %v124 = vpack.c.b16 %v113, %v112
    %v125 = vpack.c.b16 %v115, %v114
    %v126 = vpack.c.b16 %v117, %v116
    %v127 = vpack.c.b16 %v119, %v118
    %136 = vmatpush.bf16.msra.mxu0 %v127
    %137 = vmatpush.bf16.msra.mxu0 %v126
    %138 = vmatpush.bf16.msra.mxu0 %v125
    %139 = vmatpush.bf16.msra.mxu0 %v124
    %140 = vmatpush.bf16.msra.mxu0 %v123
    %141 = vmatpush.bf16.msra.mxu0 %v122
    %142 = vmatpush.bf16.msra.mxu0 %v121
    %143 = vmatpush.bf16.msra.mxu0 %v120
    %144 = vmatmul.bf16.gmra.mxu0 %v84
    %v145 = vpop.f32.mrf.mxu0
    %v146 = vadd.f32 %v86, %v145
    %v147 = vpop.f32.mrf.mxu0
    %148 = vdwg.mxu0
    %v149 = vmul.f32 %v146, 0.5
    %v150 = vmul.f32 %v146, 0.044715
    %v151 = vmul.f32 %v150, %v146
    %v152 = vmul.f32 %v151, %v146
    %v153 = vadd.f32 %v146, %v152
    %v154 = vmul.f32 %v153, 0.7978846
    %v155 = vtanh.pop %v154
    %v156 = vadd.f32 %v155, 1.0
    %v157 = vmul.f32 %v149, %v156
    %v158 = vld [vmem:[#allocation7] sm:$0xf]
    %v159 = vld [vmem:[#allocation7 + $0x4] sm:$0xf]
    %v160 = vld [vmem:[#allocation7 + $0x8] sm:$0xf]
    %v161 = vld [vmem:[#allocation7 + $0xc] sm:$0xf]
    %v162 = vld [vmem:[#allocation7 + $0x10] sm:$0xf]
    %v163 = vld [vmem:[#allocation7 + $0x14] sm:$0xf]
    %v164 = vld [vmem:[#allocation7 + $0x18] sm:$0xf]
    %v165 = vld [vmem:[#allocation7 + $0x1c] sm:$0xf]
    %v166 = vld [vmem:[#allocation7 + $0x20] sm:$0xf]
    %v167 = vld [vmem:[#allocation7 + $0x24] sm:$0xf]
    %v168 = vld [vmem:[#allocation7 + $0x28] sm:$0xf]
    %v169 = vld [vmem:[#allocation7 + $0x2c] sm:$0xf]
    %v170 = vld [vmem:[#allocation7 + $0x30] sm:$0xf]
    %v171 = vld [vmem:[#allocation7 + $0x34] sm:$0xf]
    %v172 = vld [vmem:[#allocation7 + $0x38] sm:$0xf]
    %v173 = vld [vmem:[#allocation7 + $0x3c] sm:$0xf]
    %v174 = vld [vmem:[%s4] sm:$0x1]
    %v175 = vpack.c.bf16 %v157, %v157
    %v177 = vperm.slane %v174, 0
    %v195 = vunpack.c.l.b16 %v158
    %v196 = vunpack.c.l.b16 %v159
    %v197 = vunpack.c.l.b16 %v160
    %v198 = vunpack.c.l.b16 %v161
    %v199 = vunpack.c.l.b16 %v162
    %v200 = vunpack.c.l.b16 %v163
    %v201 = vunpack.c.l.b16 %v164
    %v202 = vunpack.c.l.b16 %v165
    %v203 = vunpack.c.l.b16 %v166
    %v204 = vunpack.c.l.b16 %v167
    %v205 = vunpack.c.l.b16 %v168
    %v206 = vunpack.c.l.b16 %v169
    %v207 = vunpack.c.l.b16 %v170
    %v208 = vunpack.c.l.b16 %v171
    %v209 = vunpack.c.l.b16 %v172
    %v210 = vunpack.c.l.b16 %v173
    %v211 = vpack.c.b16 %v196, %v195
    %v212 = vpack.c.b16 %v198, %v197
    %v213 = vpack.c.b16 %v200, %v199
    %v214 = vpack.c.b16 %v202, %v201
    %v215 = vpack.c.b16 %v204, %v203
    %v216 = vpack.c.b16 %v206, %v205
    %v217 = vpack.c.b16 %v208, %v207
    %v218 = vpack.c.b16 %v210, %v209
    %227 = vmatpush.bf16.msra.mxu0 %v218
    %228 = vmatpush.bf16.msra.mxu0 %v217
    %229 = vmatpush.bf16.msra.mxu0 %v216
    %230 = vmatpush.bf16.msra.mxu0 %v215
    %231 = vmatpush.bf16.msra.mxu0 %v214
    %232 = vmatpush.bf16.msra.mxu0 %v213
    %233 = vmatpush.bf16.msra.mxu0 %v212
    %234 = vmatpush.bf16.msra.mxu0 %v211
    %235 = vmatmul.bf16.gmra.mxu0 %v175
    %v236 = vpop.f32.mrf.mxu0
    %v237 = vadd.f32 %v177, %v236
    %v238 = vpop.f32.mrf.mxu0
    %239 = vdwg.mxu0
    %v240 = vmul.f32 %v237, 0.5
    %v241 = vmul.f32 %v237, 0.044715
    %v242 = vmul.f32 %v241, %v237
    %v243 = vmul.f32 %v242, %v237
    %v244 = vadd.f32 %v237, %v243
    %v245 = vmul.f32 %v244, 0.7978846
    %v246 = vtanh.pop %v245
    %v247 = vadd.f32 %v246, 1.0
    %v248 = vmul.f32 %v240, %v247
    %249 = vst [vmem:[#allocation8] sm:$0xff] %v248
    // Predicated region
    $region34: #{tpu_custom_call.1} parent=1 // pred_check
      _
    $region35: #{tpu_custom_call.1} parent=1 // pred_check_branch
      %251 = sbr.rel (0) target = $region37
    $region36: #{tpu_custom_call.1} parent=1 // pred_region
      %253 = vsyncadd [#allocation4], 0
      %s255 = sshll.u32 [#allocation8], 4
      %s256 = int_to_ptr.vmem [resolvable:$true] %s255
      %s257 = sshll.u32 %s5, 4
      %s258 = int_to_ptr.hbm [resolvable:$true] %s257
      %260 = dma.vmem_to_hbm [thread:$0]  %s256, 128, %s258, [#allocation4]
    $region37: #{tpu_custom_call.1} parent=1 // pred_fallthru
      _
    // Predicated region
    $region38: #{tpu_custom_call.1} parent=1 // pred_check
      _
    $region39: #{tpu_custom_call.1} parent=1 // pred_check_branch
      %262 = sbr.rel (0) target = $region41
    $region40: #{tpu_custom_call.1} parent=1 // pred_region
      %264 = dma.done [#allocation4], 128
    $region41: #{tpu_custom_call.1} parent=1 // pred_fallthru
      _
    %265 = vsyncpa [#allocation3], 1
    %266 = vsyncpa [#allocation6], 1
    %267 = vsyncpa [#allocation4], 1

</llo_original>
